<compile_context>
chip_gen: v7x
topology: tpu7x:2x2x1
jax: 0.10.0
libtpu: 0.0.40
codegen_flags: <defaults>
</compile_context>

<pallas_src>
import jax
import jax.numpy as jnp
from jax.experimental import pallas as pl
from jax.experimental.pallas import tpu as pltpu


def _round_up(x, mult):
    return (x + mult - 1) // mult * mult


def _conv1x1_hardsigmoid_kernel(x_ref, w_ref, b_ref, o_ref):
    # x_ref: (Cin, TM)   pixels lane-dense (batch dim squeezed away)
    # w_ref: (Cout, Cin) pre-scaled by 1/6
    # b_ref: (Cout, 1)   = (bias + 3) / 6
    # o_ref: (Cout, TM)
    x = x_ref[...]
    w = w_ref[...]
    y = jnp.broadcast_to(b_ref[...], o_ref.shape)          # (bias+3)/6
    for ci in range(x.shape[0]):                           # static unroll, Cin = 3
        y = y + w[:, ci:ci + 1] * x[ci:ci + 1, :]          # VPU broadcast FMA
    o_ref[...] = jnp.clip(y, 0.0, 1.0).astype(o_ref.dtype)


def conv1x1_pad1_hardsigmoid(x_nchw, weight, bias, *, tm=4096):
    """x_nchw: (N, Cin, H, W); weight: (Cout, Cin, 1, 1); bias: (Cout,)."""
    n, cin, h, w = x_nchw.shape
    cout = weight.shape[0]
    hp, wp = h + 2, w + 2                      # conv padding = 1
    m = hp * wp

    # Zero-pad the 3-channel input once; the border then falls out of the same
    # kernel as hardsigmoid(bias) (PyTorch zero-padding conv semantics).
    x_pad = jnp.pad(x_nchw.astype(jnp.float32), ((0, 0), (0, 0), (1, 1), (1, 1)))
    x_cm = x_pad.reshape(n, cin, m)            # free reshape, no transpose

    # Lane-dense tiling of the pixel axis: fixed large tile, cdiv grid,
    # pad M up to grid*tile.  For N==1 force >=2 pixel steps so both v7x
    # TensorCores are used (no-op on single-TC v5e/v6e).
    m128 = _round_up(m, 128)
    tile_cap = max(128, _round_up(tm, 128))
    grid_m = pl.cdiv(m128, tile_cap)
    if n == 1 and grid_m == 1 and m128 >= 256:
        grid_m = 2
    tile = _round_up(pl.cdiv(m128, grid_m), 128)
    m_pad = grid_m * tile
    if m_pad != m:
        x_cm = jnp.pad(x_cm, ((0, 0), (0, 0), (0, m_pad - m)))

    # Fold +3 and /6:  y = clip(x @ (w/6)^T + (b+3)/6, 0, 1)
    w_mat = weight.reshape(cout, cin).astype(jnp.float32) * (1.0 / 6.0)
    b_fold = ((bias.astype(jnp.float32) + 3.0) * (1.0 / 6.0)).reshape(cout, 1)

    out_cm = pl.pallas_call(
        _conv1x1_hardsigmoid_kernel,
        out_shape=jax.ShapeDtypeStruct((n, cout, m_pad), jnp.float32),
        grid=(n, grid_m),
        in_specs=[
            pl.BlockSpec((pl.Squeezed(), cin, tile), lambda b, i: (b, 0, i)),
            pl.BlockSpec((cout, cin), lambda b, i: (0, 0)),   # weight resident
            pl.BlockSpec((cout, 1), lambda b, i: (0, 0)),     # folded bias resident
        ],
        out_specs=pl.BlockSpec((pl.Squeezed(), cout, tile), lambda b, i: (b, 0, i)),
        compiler_params=pltpu.CompilerParams(
            dimension_semantics=("parallel", "parallel")),
    )(x_cm, w_mat, b_fold)

    if m_pad != m:
        out_cm = out_cm[:, :, :m]
    return out_cm.reshape(n, cout, hp, wp)


def reference(x_nchw, weight, bias):
    # Pure-JAX reference of the PyTorch forward.
    n, cin, h, w = x_nchw.shape
    cout = weight.shape[0]
    x_p = jnp.pad(x_nchw, ((0, 0), (0, 0), (1, 1), (1, 1)))
    y = jnp.einsum("nchw,oc->nohw", x_p, weight.reshape(cout, cin))
    y = y + bias.reshape(1, cout, 1, 1)
    return jnp.clip(y + 3.0, 0.0, 6.0) / 6.0


if __name__ == "__main__":
    key = jax.random.PRNGKey(0)
    kx, kw, kb = jax.random.split(key, 3)

    # Small shapes consistent with the module: Cin=3 -> Cout=8, spatial 16x16.
    x = jax.random.normal(kx, (2, 3, 16, 16), dtype=jnp.float32)
    weight = jax.random.normal(kw, (8, 3, 1, 1), dtype=jnp.float32) * 0.1
    bias = jax.random.normal(kb, (8,), dtype=jnp.float32) * 0.1

    out = jax.block_until_ready(conv1x1_pad1_hardsigmoid(x, weight, bias))
    ref = jax.block_until_ready(reference(x, weight, bias))

    assert out.shape == (2, 8, 18, 18), out.shape
    assert jnp.allclose(out, ref, atol=1e-5, rtol=1e-5), "mismatch vs reference"
    print("KERNEL_OK")
</pallas_src>

<mosaic_0001>
module attributes {stable_mosaic.version = 11 : i64} {
  func.func @_conv1x1_hardsigmoid_kernel(%arg0: i32, %arg1: i32, %arg2: memref<1x3x384xf32, #tpu.memory_space<vmem>>, %arg3: memref<8x3xf32, #tpu.memory_space<vmem>>, %arg4: memref<8x1xf32, #tpu.memory_space<vmem>>, %arg5: memref<1x8x384xf32, #tpu.memory_space<vmem>>) attributes {dimension_semantics = [#tpu.dimension_semantics<parallel>, #tpu.dimension_semantics<parallel>], iteration_bounds = array<i64: 2, 1>, scalar_prefetch = 0 : i64, scratch_operands = 0 : i64, tpu.core_type = #tpu.core_type<tc>, window_params = [{transform_indices = @transform_0, window_bounds = array<i64: 1, 3, 384>}, {pipeline_mode = #tpu.pipeline_mode<synchronous>, transform_indices = @transform_1, window_bounds = array<i64: 8, 3>}, {pipeline_mode = #tpu.pipeline_mode<synchronous>, transform_indices = @transform_2, window_bounds = array<i64: 8, 1>}, {transform_indices = @transform_3, window_bounds = array<i64: 1, 8, 384>}]} {
    %c0 = arith.constant 0 : index
    %c0_0 = arith.constant 0 : index
    %c0_1 = arith.constant 0 : index
    %0 = vector.load %arg2[%c0, %c0_0, %c0_1] : memref<1x3x384xf32, #tpu.memory_space<vmem>>, vector<1x3x384xf32>
    %1 = vector.shape_cast %0 : vector<1x3x384xf32> to vector<3x384xf32>
    %c0_2 = arith.constant 0 : index
    %c0_3 = arith.constant 0 : index
    %2 = vector.load %arg3[%c0_2, %c0_3] : memref<8x3xf32, #tpu.memory_space<vmem>>, vector<8x3xf32>
    %c0_4 = arith.constant 0 : index
    %c0_5 = arith.constant 0 : index
    %3 = vector.load %arg4[%c0_4, %c0_5] : memref<8x1xf32, #tpu.memory_space<vmem>>, vector<8x1xf32>
    %4 = vector.shape_cast %3 : vector<8x1xf32> to vector<8x1xf32>
    %5 = vector.broadcast %4 : vector<8x1xf32> to vector<8x384xf32>
    %6 = vector.extract_strided_slice %2 {offsets = [0, 0], sizes = [8, 1], strides = [1, 1]} : vector<8x3xf32> to vector<8x1xf32>
    %7 = vector.extract_strided_slice %1 {offsets = [0, 0], sizes = [1, 384], strides = [1, 1]} : vector<3x384xf32> to vector<1x384xf32>
    %8 = vector.broadcast %6 : vector<8x1xf32> to vector<8x384xf32>
    %9 = vector.broadcast %7 : vector<1x384xf32> to vector<8x384xf32>
    %10 = arith.mulf %8, %9 : vector<8x384xf32>
    %11 = arith.addf %5, %10 : vector<8x384xf32>
    %12 = vector.extract_strided_slice %2 {offsets = [0, 1], sizes = [8, 1], strides = [1, 1]} : vector<8x3xf32> to vector<8x1xf32>
    %13 = vector.extract_strided_slice %1 {offsets = [1, 0], sizes = [1, 384], strides = [1, 1]} : vector<3x384xf32> to vector<1x384xf32>
    %14 = vector.broadcast %12 : vector<8x1xf32> to vector<8x384xf32>
    %15 = vector.broadcast %13 : vector<1x384xf32> to vector<8x384xf32>
    %16 = arith.mulf %14, %15 : vector<8x384xf32>
    %17 = arith.addf %11, %16 : vector<8x384xf32>
    %18 = vector.extract_strided_slice %2 {offsets = [0, 2], sizes = [8, 1], strides = [1, 1]} : vector<8x3xf32> to vector<8x1xf32>
    %19 = vector.extract_strided_slice %1 {offsets = [2, 0], sizes = [1, 384], strides = [1, 1]} : vector<3x384xf32> to vector<1x384xf32>
    %20 = vector.broadcast %18 : vector<8x1xf32> to vector<8x384xf32>
    %21 = vector.broadcast %19 : vector<1x384xf32> to vector<8x384xf32>
    %22 = arith.mulf %20, %21 : vector<8x384xf32>
    %23 = arith.addf %17, %22 : vector<8x384xf32>
    %cst = arith.constant 0.000000e+00 : f32
    %cst_6 = arith.constant 1.000000e+00 : f32
    %24 = vector.broadcast %cst : f32 to vector<8x384xf32>
    %25 = arith.maximumf %24, %23 : vector<8x384xf32>
    %26 = vector.broadcast %cst_6 : f32 to vector<8x384xf32>
    %27 = arith.minimumf %26, %25 : vector<8x384xf32>
    %c0_7 = arith.constant 0 : index
    %c0_8 = arith.constant 0 : index
    %c0_9 = arith.constant 0 : index
    %28 = vector.load %arg5[%c0_7, %c0_8, %c0_9] : memref<1x8x384xf32, #tpu.memory_space<vmem>>, vector<1x8x384xf32>
    %29 = vector.shape_cast %28 : vector<1x8x384xf32> to vector<8x384xf32>
    %30 = vector.shape_cast %27 : vector<8x384xf32> to vector<1x8x384xf32>
    tpu.vector_store %arg5[%c0_7, %c0_8, %c0_9], %30 {strides = array<i32>} : memref<1x8x384xf32, #tpu.memory_space<vmem>>, vector<1x8x384xf32>,
    return
  }
  func.func @transform_0(%arg0: i32, %arg1: i32) -> (i32, i32, i32) {
    %c0_i32 = arith.constant 0 : i32
    %c0_i32_0 = arith.constant 0 : i32
    return %arg0, %c0_i32, %arg1 : i32, i32, i32
  }
  func.func @transform_1(%arg0: i32, %arg1: i32) -> (i32, i32) {
    %c0_i32 = arith.constant 0 : i32
    %c0_i32_0 = arith.constant 0 : i32
    %c0_i32_1 = arith.constant 0 : i32
    return %c0_i32, %c0_i32_0 : i32, i32
  }
  func.func @transform_2(%arg0: i32, %arg1: i32) -> (i32, i32) {
    %c0_i32 = arith.constant 0 : i32
    %c0_i32_0 = arith.constant 0 : i32
    %c0_i32_1 = arith.constant 0 : i32
    return %c0_i32, %c0_i32_0 : i32, i32
  }
  func.func @transform_3(%arg0: i32, %arg1: i32) -> (i32, i32, i32) {
    %c0_i32 = arith.constant 0 : i32
    %c0_i32_0 = arith.constant 0 : i32
    return %arg0, %c0_i32, %arg1 : i32, i32, i32
  }
}

</mosaic_0001>

<llo_original>
// kernel: tpu_custom_call.1
$region0: #{tpu_custom_call.1}
  #allocation0 [shape = 'u32[]', space=smem, size = 0x4, offset = 0x4, fixed_abs, tag = 'smem constant byte address 0x4 - core index']
  #allocation1 [shape = 'u32[144,128]{1,0:T(1,128)}', space=vmem, size = 0x12000, scoped, tag = 'internal scratch']
  %s0 = inlined_call_operand.vmem [shape: f32[2,3,384], index: 0, kind: input, shape index: {}]
  %s1 = inlined_call_operand.vmem [shape: f32[8,3], index: 1, kind: input, shape index: {}]
  %s2 = inlined_call_operand.vmem [shape: f32[8,1], index: 2, kind: input, shape index: {}]
  %s3 = inlined_call_operand.hbm [shape: f32[2,8,384], index: 3, kind: output, shape index: {}]
  %s4 = sld [smem:[#allocation0]]
  $region45: #{tpu_custom_call.1} parent=0
    _
  %s6 = ssub.s32 1, %s4
  %s7 = scalar_select 0, %s6, %s4
  $region1: #{tpu_custom_call.1} parent=0
    #allocation2 [shape = 'u8[24576]{0}', space=vmem, size = 0x6000, scoped, tag = 'output window, operand 0']
    #allocation3 [shape = 's32[2]{0}', space=sflag, size = 0x8, scoped, tag = 'scoped memory for tpu_custom_call.1']
    %8 = vsyncpa [#allocation3], 0
    %s9 = scalar_lea.sflag [#allocation3], 1
    %10 = vsyncpa %s9, 0
    loop: start=0, step=1, limit=4
    $region2: #{tpu_custom_call.1} parent=1 // loop_pre_header
      _
    $region3: #{tpu_custom_call.1} parent=1 // loop_header
      %s12 = sphi 0, %s16
      %p13 = scmp.ge.s32.totalorder %s12, 4
      %s19 = sphi 0, %s31
      %s20 = sphi 0, %s27
      %s21 = sphi 0, %s19
      %s22 = sphi 0, %s20
      %s23 = sphi 0, %s21
      %s24 = sphi 0, %s22
      %s36 = sphi 0, %s38
      %s39 = sphi 0, %s36
      %s40 = sphi 0, %s39
      %s56 = sphi 0, %s40
      %s60 = sphi 0, %s60
      %s62 = sphi 0, %s60
      %s63 = sphi 0, %s62
      %s77 = sphi 0, %s63
      %s81 = sphi 0, %s81
      %s83 = sphi 0, %s81
      %s84 = sphi 0, %s83
      %s98 = sphi 0, %s84
      %s106 = sphi 0, %s108
      %s109 = sphi 0, %s106
      %s110 = sphi 0, %s109
      %s126 = sphi 0, %s110
    $region4: #{tpu_custom_call.1} parent=1 // loop_header_branch
      %15 = sbr.rel (%p13) target = $region8
    $region5: #{tpu_custom_call.1} parent=1 // loop_body
      %s17 = ssub.s32 %s12, 1
      %s18 = ssub.s32 %s12, 2
      %s25 = sadd.s32 1, %s20
      %p26 = scmp.ge.s32.totalorder %s25, 1
      %s27 = scalar_select %p26, 0, %s25
      %s28 = sadd.s32 1, %s19
      %s29 = scalar_select %p26, %s28, %s19
      %p30 = scmp.ge.s32.totalorder %s29, 2
      %s31 = scalar_select %p30, 0, %s29
      %s32 = ssub.s32 %s19, %s31
      %s33 = ssub.s32 %s20, %s27
      %s34 = sor.u32 %s32, %s33
      %p35 = scmp.eq.s32.totalorder %s34, 0
      %s37 = sadd.s32 %s36, 1
      %s38 = scalar_select %p35, %s36, %s37
      %p41 = pneg %p35
      %p42 = scmp.eq.s32.totalorder %s12, 1
      %p43 = por %p41, %p42
      %p44 = scmp.ne.s32.totalorder %s36, %s39
      %p45 = scmp.eq.s32.totalorder %s12, 0
      %p46 = por %p44, %p45
      %p47 = scmp.ne.s32.totalorder %s36, %s39
      %p48 = scmp.eq.s32.totalorder %s17, 1
      %p49 = por %p47, %p48
      %p50 = scmp.ne.s32.totalorder %s39, %s40
      %p51 = scmp.eq.s32.totalorder %s17, 0
      %p52 = por %p50, %p51
      %p53 = scmp.ne.s32.totalorder %s39, %s40
      %p54 = scmp.eq.s32.totalorder %s18, 1
      %p55 = por %p53, %p54
      %p57 = scmp.ne.s32.totalorder %s40, %s56
      %p58 = scmp.eq.s32.totalorder %s18, 0
      %p59 = por %p57, %p58
      %s61 = sadd.s32 %s60, 1
      %p64 = scmp.eq.s32.totalorder %s12, 1
      %p65 = scmp.ne.s32.totalorder %s60, %s62
      %p66 = scmp.eq.s32.totalorder %s12, 0
      %p67 = por %p65, %p66
      %p68 = scmp.ne.s32.totalorder %s60, %s62
      %p69 = scmp.eq.s32.totalorder %s17, 1
      %p70 = por %p68, %p69
      %p71 = scmp.ne.s32.totalorder %s62, %s63
      %p72 = scmp.eq.s32.totalorder %s17, 0
      %p73 = por %p71, %p72
      %p74 = scmp.ne.s32.totalorder %s62, %s63
      %p75 = scmp.eq.s32.totalorder %s18, 1
      %p76 = por %p74, %p75
      %p78 = scmp.ne.s32.totalorder %s63, %s77
      %p79 = scmp.eq.s32.totalorder %s18, 0
      %p80 = por %p78, %p79
      %s82 = sadd.s32 %s81, 1
      %p85 = scmp.eq.s32.totalorder %s12, 1
      %p86 = scmp.ne.s32.totalorder %s81, %s83
      %p87 = scmp.eq.s32.totalorder %s12, 0
      %p88 = por %p86, %p87
      %p89 = scmp.ne.s32.totalorder %s81, %s83
      %p90 = scmp.eq.s32.totalorder %s17, 1
      %p91 = por %p89, %p90
      %p92 = scmp.ne.s32.totalorder %s83, %s84
      %p93 = scmp.eq.s32.totalorder %s17, 0
      %p94 = por %p92, %p93
      %p95 = scmp.ne.s32.totalorder %s83, %s84
      %p96 = scmp.eq.s32.totalorder %s18, 1
      %p97 = por %p95, %p96
      %p99 = scmp.ne.s32.totalorder %s84, %s98
      %p100 = scmp.eq.s32.totalorder %s18, 0
      %p101 = por %p99, %p100
      %s102 = ssub.s32 %s19, %s31
      %s103 = ssub.s32 %s20, %s27
      %s104 = sor.u32 %s102, %s103
      %p105 = scmp.eq.s32.totalorder %s104, 0
      %s107 = sadd.s32 %s106, 1
      %s108 = scalar_select %p105, %s106, %s107
      %p111 = pneg %p105
      %p112 = scmp.eq.s32.totalorder %s12, 1
      %p113 = por %p111, %p112
      %p114 = scmp.ne.s32.totalorder %s106, %s109
      %p115 = scmp.eq.s32.totalorder %s12, 0
      %p116 = por %p114, %p115
      %p117 = scmp.ne.s32.totalorder %s106, %s109
      %p118 = scmp.eq.s32.totalorder %s17, 1
      %p119 = por %p117, %p118
      %p120 = scmp.ne.s32.totalorder %s109, %s110
      %p121 = scmp.eq.s32.totalorder %s17, 0
      %p122 = por %p120, %p121
      %p123 = scmp.ne.s32.totalorder %s109, %s110
      %p124 = scmp.eq.s32.totalorder %s18, 1
      %p125 = por %p123, %p124
      %p127 = scmp.ne.s32.totalorder %s110, %s126
      %p128 = scmp.eq.s32.totalorder %s18, 0
      %p129 = por %p127, %p128
      %p130 = scmp.le.s32.totalorder 1, %s12
      %p131 = scmp.lt.s32.totalorder %s12, 3
      %p132 = pnand %p130, %p131
      %p133 = pneg %p132
      // Predicated region
      $region9: #{tpu_custom_call.1} parent=5 // pred_check
        _
      $region10: #{tpu_custom_call.1} parent=5 // pred_check_branch
        %135 = sbr.rel (%p132) target = $region12
      $region11: #{tpu_custom_call.1} parent=5 // pred_region
        %s136 = ssub.s32 %s12, 1
        // Predicated region
        $region13: #{tpu_custom_call.1} parent=11 // pred_check
          %p137 = pneg %p73
        $region14: #{tpu_custom_call.1} parent=11 // pred_check_branch
          %139 = sbr.rel (%p137) target = $region16
        $region15: #{tpu_custom_call.1} parent=11 // pred_region
          _
        $region16: #{tpu_custom_call.1} parent=11 // pred_fallthru
          _
        // Predicated region
        $region17: #{tpu_custom_call.1} parent=11 // pred_check
          %p140 = pneg %p94
        $region18: #{tpu_custom_call.1} parent=11 // pred_check_branch
          %142 = sbr.rel (%p140) target = $region20
        $region19: #{tpu_custom_call.1} parent=11 // pred_region
          _
        $region20: #{tpu_custom_call.1} parent=11 // pred_fallthru
          _
      $region12: #{tpu_custom_call.1} parent=5 // pred_fallthru
        _
      %p143 = scmp.lt.s32.totalorder %s12, 2
      // Predicated region
      $region21: #{tpu_custom_call.1} parent=5 // pred_check
        %p144 = pneg %p143
      $region22: #{tpu_custom_call.1} parent=5 // pred_check_branch
        %146 = sbr.rel (%p144) target = $region24
      $region23: #{tpu_custom_call.1} parent=5 // pred_region
        // Predicated region
        $region25: #{tpu_custom_call.1} parent=23 // pred_check
          %p147 = pneg %p46
        $region26: #{tpu_custom_call.1} parent=23 // pred_check_branch
          %149 = sbr.rel (%p147) target = $region28
        $region27: #{tpu_custom_call.1} parent=23 // pred_region
          %s150 = smul.u32 3, %s20
          %p151 = scmp.lt.s32.totalorder %s19, 1
          %s152 = scalar_select %p151, %s19, 1
          %p153 = scmp.lt.s32.totalorder %s150, 2
          %s154 = scalar_select %p153, %s150, 2
          %s155 = smul.addr %s152, 3
          %s156 = sadd.s32 %s154, %s155
          %s157 = smul.addr %s156, 4
          %s158 = scalar_lea.vmem %s0, %s157
          %s159 = smul.u32 3, %s20
        $region28: #{tpu_custom_call.1} parent=23 // pred_fallthru
          _
      $region24: #{tpu_custom_call.1} parent=5 // pred_fallthru
        _
      %p160 = scmp.le.s32.totalorder 1, %s12
      %p161 = scmp.lt.s32.totalorder %s12, 3
      %p162 = pnand %p160, %p161
      %p163 = pneg %p162
      // Predicated region
      $region29: #{tpu_custom_call.1} parent=5 // pred_check
        _
      $region30: #{tpu_custom_call.1} parent=5 // pred_check_branch
        %165 = sbr.rel (%p162) target = $region32
      $region31: #{tpu_custom_call.1} parent=5 // pred_region
        %s166 = ssub.s32 %s12, 1
        %s167 = smul.u32 3, %s22
        %p168 = scmp.lt.s32.totalorder %s21, 1
        %s169 = scalar_select %p168, %s21, 1
        %p170 = scmp.lt.s32.totalorder %s167, 2
        %s171 = scalar_select %p170, %s167, 2
        %s172 = smul.addr %s169, 3
        %s173 = sadd.s32 %s171, %s172
        %s174 = smul.addr %s173, 4
        %s175 = scalar_lea.vmem %s0, %s174
        %p176 = pneg %p52
        %p177 = pneg %p49
        %p178 = pneg %p73
        %p179 = pneg %p70
        %p180 = pneg %p94
        %p181 = pneg %p91
        %p182 = pneg %p122
        %p183 = pneg %p119
        %s184 = sand.u32 %s109, 1
        %s185 = scalar_lea.sflag [#allocation3], %s184
        %s186 = sand.u32 %s109, 1
        %s187 = smul.addr %s186, 24
        %s188 = scalar_lea.vmem [#allocation2], %s187
        %s189 = smul.u32 3, %s22
        %p190 = scmp.lt.s32.totalorder %s21, 1
        %s191 = scalar_select %p190, %s21, 1
        %p192 = scmp.lt.s32.totalorder %s189, 2
        %s193 = scalar_select %p192, %s189, 2
        %s194 = smul.addr %s191, 3
        %s195 = sadd.s32 %s193, %s194
        %s196 = smul.addr %s195, 4
        %s197 = scalar_lea.vmem %s0, %s196
        %s198 = smul.u32 3, %s22
        %s199 = smul.u32 3, %s22
        %v200 = vld [vmem:[%s197] sm:$0x77]
        %v201 = vld [vmem:[%s197 + $0x8] sm:$0x7]
        %v202 = vld [vmem:[%s1] sm:$0xff]
        %v203 = vld [vmem:[%s2] sm:$0xff]
        %205 = vset.pattern.permute.xlu0 0
        %206 = vperm.xlu0 %205, %v203
        %v207 = vpop.permute.xlu0 %206
        %210 = vset.pattern.permute.xlu0 0
        %211 = vperm.xlu0 %210, %v202
        %v212 = vpop.permute.xlu0 %211
        %v216 = vlaneseq
        %v217 = vshrl.u32 %v216, 7
        %v218 = vsub.s32 0, %v217
        %v219 = vrot.slane %v200, %v218
        %v220 = vlaneseq
        %v221 = vshrl.u32 %v220, 7
        %v222 = vsub.s32 4, %v221
        %v223 = vrot.slane %v200, %v222
        %v224 = vlaneseq
        %v225 = vshrl.u32 %v224, 7
        %v226 = vsub.s32 0, %v225
        %v227 = vrot.slane %v201, %v226
        %v231 = vlaneseq
        %v232 = vshrl.u32 %v231, 7
        %v233 = vsub.s32 0, %v232
        %v234 = vrot.slane %v219, %v233
        %v235 = vlaneseq
        %v236 = vshrl.u32 %v235, 7
        %v237 = vsub.s32 0, %v236
        %v238 = vrot.slane %v223, %v237
        %v239 = vlaneseq
        %v240 = vshrl.u32 %v239, 7
        %v241 = vsub.s32 0, %v240
        %v242 = vrot.slane %v227, %v241
        %v243 = vmul.f32 %v212, %v234
        %v244 = vmul.f32 %v212, %v238
        %v245 = vmul.f32 %v212, %v242
        %v246 = vadd.f32 %v207, %v243
        %v247 = vadd.f32 %v207, %v244
        %v248 = vadd.f32 %v207, %v245
        %249 = vset.pattern.permute.xlu0 1
        %250 = vperm.xlu0 %249, %v202
        %v251 = vpop.permute.xlu0 %250
        %v253 = vlaneseq
        %v254 = vshrl.u32 %v253, 7
        %v255 = vsub.s32 1, %v254
        %v256 = vrot.slane %v200, %v255
        %v257 = vlaneseq
        %v258 = vshrl.u32 %v257, 7
        %v259 = vsub.s32 5, %v258
        %v260 = vrot.slane %v200, %v259
        %v261 = vlaneseq
        %v262 = vshrl.u32 %v261, 7
        %v263 = vsub.s32 1, %v262
        %v264 = vrot.slane %v201, %v263
        %v268 = vlaneseq
        %v269 = vshrl.u32 %v268, 7
        %v270 = vsub.s32 1, %v269
        %v271 = vrot.slane %v256, %v270
        %v272 = vlaneseq
        %v273 = vshrl.u32 %v272, 7
        %v274 = vsub.s32 1, %v273
        %v275 = vrot.slane %v260, %v274
        %v276 = vlaneseq
        %v277 = vshrl.u32 %v276, 7
        %v278 = vsub.s32 1, %v277
        %v279 = vrot.slane %v264, %v278
        %v280 = vmul.f32 %v251, %v271
        %v281 = vmul.f32 %v251, %v275
        %v282 = vmul.f32 %v251, %v279
        %v283 = vadd.f32 %v246, %v280
        %v284 = vadd.f32 %v247, %v281
        %v285 = vadd.f32 %v248, %v282
        %286 = vset.pattern.permute.xlu0 2
        %287 = vperm.xlu0 %286, %v202
        %v288 = vpop.permute.xlu0 %287
        %v290 = vlaneseq
        %v291 = vshrl.u32 %v290, 7
        %v292 = vsub.s32 2, %v291
        %v293 = vrot.slane %v200, %v292
        %v294 = vlaneseq
        %v295 = vshrl.u32 %v294, 7
        %v296 = vsub.s32 6, %v295
        %v297 = vrot.slane %v200, %v296
        %v298 = vlaneseq
        %v299 = vshrl.u32 %v298, 7
        %v300 = vsub.s32 2, %v299
        %v301 = vrot.slane %v201, %v300
        %v305 = vlaneseq
        %v306 = vshrl.u32 %v305, 7
        %v307 = vsub.s32 2, %v306
        %v308 = vrot.slane %v293, %v307
        %v309 = vlaneseq
        %v310 = vshrl.u32 %v309, 7
        %v311 = vsub.s32 2, %v310
        %v312 = vrot.slane %v297, %v311
        %v313 = vlaneseq
        %v314 = vshrl.u32 %v313, 7
        %v315 = vsub.s32 2, %v314
        %v316 = vrot.slane %v301, %v315
        %v317 = vmul.f32 %v288, %v308
        %v318 = vmul.f32 %v288, %v312
        %v319 = vmul.f32 %v288, %v316
        %v320 = vadd.f32 %v283, %v317
        %v321 = vadd.f32 %v284, %v318
        %v322 = vadd.f32 %v285, %v319
        %v323 = vmax.f32 %v320, 0.0
        %v324 = vmax.f32 %v321, 0.0
        %v325 = vmax.f32 %v322, 0.0
        %v326 = vmin.f32 %v323, 1.0
        %v327 = vmin.f32 %v324, 1.0
        %v328 = vmin.f32 %v325, 1.0
        %329 = vst [vmem:[%s188] sm:$0xff] %v326
        %330 = vst [vmem:[%s188 + $0x8] sm:$0xff] %v327
        %331 = vst [vmem:[%s188 + $0x10] sm:$0xff] %v328
        %s332 = sand.u32 %s109, 1
        %s333 = scalar_lea.sflag [#allocation3], %s332
        %s334 = sand.u32 %s109, 1
        %s335 = smul.addr %s334, 24
        %s336 = scalar_lea.vmem [#allocation2], %s335
        // Predicated region
        $region33: #{tpu_custom_call.1} parent=31 // pred_check
          %p337 = pneg %p119
        $region34: #{tpu_custom_call.1} parent=31 // pred_check_branch
          %339 = sbr.rel (%p337) target = $region36
        $region35: #{tpu_custom_call.1} parent=31 // pred_region
          %s340 = smul.u32 3, %s22
          %s342 = ssub.s32 384, 384
          %343 = vsyncadd %s333, %s342
          %s344 = smul.addr %s21, 3
          %s345 = sadd.s32 %s340, %s344
          %s346 = smul.addr %s345, 128
          %s347 = scalar_lea.hbm %s3, %s346
          %s349 = sshll.u32 %s336, 4
          %s350 = int_to_ptr.vmem [resolvable:$true] %s349
          %352 = dma.vmem_to_hbm [thread:$0]  %s350, 384, %s347, %s333
        $region36: #{tpu_custom_call.1} parent=31 // pred_fallthru
          _
      $region32: #{tpu_custom_call.1} parent=5 // pred_fallthru
        _
      %p353 = scmp.le.s32.totalorder 2, %s12
      // Predicated region
      $region37: #{tpu_custom_call.1} parent=5 // pred_check
        %p354 = pneg %p353
      $region38: #{tpu_custom_call.1} parent=5 // pred_check_branch
        %356 = sbr.rel (%p354) target = $region40
      $region39: #{tpu_custom_call.1} parent=5 // pred_region
        %s357 = ssub.s32 %s12, 2
        // Predicated region
        $region41: #{tpu_custom_call.1} parent=39 // pred_check
          %p358 = pneg %p125
        $region42: #{tpu_custom_call.1} parent=39 // pred_check_branch
          %360 = sbr.rel (%p358) target = $region44
        $region43: #{tpu_custom_call.1} parent=39 // pred_region
          %s361 = sand.u32 %s110, 1
          %s362 = scalar_lea.sflag [#allocation3], %s361
          %s363 = sand.u32 %s110, 1
          %s364 = smul.addr %s363, 24
          %s365 = scalar_lea.vmem [#allocation2], %s364
          %366 = dma.done %s362, 384
        $region44: #{tpu_custom_call.1} parent=39 // pred_fallthru
          _
      $region40: #{tpu_custom_call.1} parent=5 // pred_fallthru
        _
    $region6: #{tpu_custom_call.1} parent=1 // loop_footer
      %s16 = sadd.s32 1, %s12
    $region7: #{tpu_custom_call.1} parent=1 // loop_footer_branch
      %11 = sbr.rel target = $region3
    $region8: #{tpu_custom_call.1} parent=1 // loop_exit
      _
    %367 = vsyncpa [#allocation3], 1
    %s368 = scalar_lea.sflag [#allocation3], 1
    %369 = vsyncpa %s368, 1

</llo_original>
